<compile_context>
chip_gen: v7x
topology: tpu7x:2x2x1
jax: 0.10.0
libtpu: 0.0.40
codegen_flags: <defaults>
</compile_context>

<pallas_src>
import math
import numpy as np
import jax
import jax.numpy as jnp
from jax.experimental import pallas as pl
from jax.experimental.pallas import tpu as pltpu

# ---------------- module hyper-parameters (small, consistent with the spec) --
SEQ_LEN = 8          # seq_length  (L)
PATCH   = 2          # patch_size
STRIDE  = 2          # stride
IN_CH   = 4          # in_channels (C)
HIDDEN  = 32         # hidden_size
NUM_PATCHES = (SEQ_LEN - PATCH) // STRIDE + 1          # = 4
BATCH   = 2


# ---------------- Pallas kernel ----------------------------------------------
def _patch_embed_kernel(x_ref, w_ref, b_ref, o_ref):
    # x: (B, L*C)   w: (L*C, NP*H)  (pre-transposed, patch-extraction folded in)
    # b: (1, NP*H)  o: (B, NP*H)
    o_ref[...] = (jnp.dot(x_ref[...], w_ref[...],
                          preferred_element_type=jnp.float32) + b_ref[...])


def _vmem():
    return pl.BlockSpec(memory_space=pltpu.MemorySpace.VMEM)


@jax.jit
def patch_embed_forward(x, w_big, b_big):
    """x: (B, L, C) float32 -> (B, NUM_PATCHES, HIDDEN) float32."""
    B, L, C = x.shape
    x2 = x.reshape(B, L * C)                     # contiguous: free bitcast
    out2 = pl.pallas_call(
        _patch_embed_kernel,
        out_shape=jax.ShapeDtypeStruct((B, NUM_PATCHES * HIDDEN), jnp.float32),
        in_specs=[_vmem(), _vmem(), _vmem()],
        out_specs=_vmem(),
    )(x2, w_big, b_big)
    return out2.reshape(B, NUM_PATCHES, HIDDEN)  # contiguous: free bitcast


# ---------------- one-time weight folding (host side, at init) ---------------
def fold_patch_embed_weights(w, b):
    """Fold torch's unfold->permute(0,2,1,3)->reshape(B,NP,-1) into the Linear.

    w: (HIDDEN, PATCH*IN_CH) in PyTorch nn.Linear layout, b: (HIDDEN,).
    Returns w_big: (SEQ_LEN*IN_CH, NUM_PATCHES*HIDDEN), b_big: (1, NUM_PATCHES*HIDDEN)
    such that  (x.reshape(B, L*C) @ w_big + b_big)[b, p*H + h]
               == Linear(patches)[b, p, h]   exactly (same linear map).
    """
    cp = IN_CH * PATCH
    w_np = np.asarray(w, np.float32)
    w_big = np.zeros((SEQ_LEN * IN_CH, NUM_PATCHES * HIDDEN), np.float32)
    for p_out in range(NUM_PATCHES):
        for k in range(cp):
            # torch: Y[b,c,p,s] = x[b, p*STRIDE + s, c]  (after unfold+permute)
            #        patches[b, p_out, k] = row-major-flat(Y[b])[p_out*cp + k]
            f = p_out * cp + k
            c = f // (NUM_PATCHES * PATCH)
            rem = f % (NUM_PATCHES * PATCH)
            p, s = rem // PATCH, rem % PATCH
            src = (p * STRIDE + s) * IN_CH + c          # column of x.reshape(B, L*C)
            w_big[src, p_out * HIDDEN:(p_out + 1) * HIDDEN] += w_np[:, k]
    b_big = np.tile(np.asarray(b, np.float32).reshape(-1), NUM_PATCHES)[None, :]
    return jnp.asarray(w_big), jnp.asarray(b_big)


# ---------------- pure-JAX reference (direct replication of the torch ops) ---
def _reference_forward(x, w, b):
    B = x.shape[0]
    idx = (np.arange(NUM_PATCHES)[:, None] * STRIDE
           + np.arange(PATCH)[None, :])                    # (NP, P)
    unf = x[:, idx, :]                                     # (B, NP, P, C)
    unf = jnp.transpose(unf, (0, 1, 3, 2))                 # (B, NP, C, P) == torch unfold
    y = jnp.transpose(unf, (0, 2, 1, 3))                   # permute(0, 2, 1, 3)
    patches = y.reshape(B, NUM_PATCHES, IN_CH * PATCH)     # torch .reshape(B, NP, -1)
    return jnp.einsum("bpk,hk->bph", patches, w,
                      precision=jax.lax.Precision.HIGHEST) + b[None, None, :]


# ---------------- main --------------------------------------------------------
if __name__ == "__main__":
    key = jax.random.PRNGKey(0)
    kx, kw, kb = jax.random.split(key, 3)

    # input (B, L, C) and PyTorch-nn.Linear-style init for proj
    x = jax.random.normal(kx, (BATCH, SEQ_LEN, IN_CH), jnp.float32)
    bound = 1.0 / math.sqrt(PATCH * IN_CH)
    w = jax.random.uniform(kw, (HIDDEN, PATCH * IN_CH), jnp.float32, -bound, bound)
    b = jax.random.uniform(kb, (HIDDEN,), jnp.float32, -bound, bound)

    w_big, b_big = fold_patch_embed_weights(w, b)

    out = jax.block_until_ready(patch_embed_forward(x, w_big, b_big))
    assert out.shape == (BATCH, NUM_PATCHES, HIDDEN), out.shape

    # sanity check against a direct replication of the torch forward
    ref = jax.block_until_ready(_reference_forward(x, w, b))
    max_diff = float(jnp.max(jnp.abs(out - ref)))
    assert max_diff < 2e-2, f"mismatch vs reference: max |diff| = {max_diff}"

    print("KERNEL_OK")
</pallas_src>

<mosaic_0001>
module attributes {stable_mosaic.version = 11 : i64} {
  func.func @_patch_embed_kernel(%arg0: memref<2x32xf32, #tpu.memory_space<vmem>>, %arg1: memref<32x128xf32, #tpu.memory_space<vmem>>, %arg2: memref<1x128xf32, #tpu.memory_space<vmem>>, %arg3: memref<2x128xf32, #tpu.memory_space<vmem>>) attributes {dimension_semantics = [], scalar_prefetch = 0 : i64, scratch_operands = 0 : i64, tpu.core_type = #tpu.core_type<tc>} {
    %c0 = arith.constant 0 : index
    %c0_0 = arith.constant 0 : index
    %0 = vector.load %arg0[%c0, %c0_0] : memref<2x32xf32, #tpu.memory_space<vmem>>, vector<2x32xf32>
    %c0_1 = arith.constant 0 : index
    %c0_2 = arith.constant 0 : index
    %1 = vector.load %arg1[%c0_1, %c0_2] : memref<32x128xf32, #tpu.memory_space<vmem>>, vector<32x128xf32>
    %cst = arith.constant dense<0.000000e+00> : vector<2x128xf32>
    %2 = tpu.matmul %0, %1, %cst {dimension_numbers = #tpu.dot_dimension_numbers<[1], [0], [0], [1], [0, 0, 1, 1], [], []>} : vector<2x32xf32>, vector<32x128xf32>, vector<2x128xf32> -> vector<2x128xf32>
    %c0_3 = arith.constant 0 : index
    %c0_4 = arith.constant 0 : index
    %3 = vector.load %arg2[%c0_3, %c0_4] : memref<1x128xf32, #tpu.memory_space<vmem>>, vector<1x128xf32>
    %4 = vector.broadcast %3 : vector<1x128xf32> to vector<2x128xf32>
    %5 = arith.addf %2, %4 : vector<2x128xf32>
    %c0_5 = arith.constant 0 : index
    %c0_6 = arith.constant 0 : index
    %6 = vector.load %arg3[%c0_5, %c0_6] : memref<2x128xf32, #tpu.memory_space<vmem>>, vector<2x128xf32>
    tpu.vector_store %arg3[%c0_5, %c0_6], %5 {strides = array<i32>} : memref<2x128xf32, #tpu.memory_space<vmem>>, vector<2x128xf32>,
    return
  }
}

</mosaic_0001>

<llo_original>
// kernel: patch_embed_forward.1
$region0: #{patch_embed_forward.1}
  #allocation0 [shape = 'u32[]', space=smem, size = 0x4, offset = 0x4, fixed_abs, tag = 'smem constant byte address 0x4 - core index']
  #allocation1 [shape = 'u32[144,128]{1,0:T(1,128)}', space=vmem, size = 0x12000, scoped, tag = 'internal scratch']
  %s0 = inlined_call_operand.vmem [shape: f32[2,32], index: 0, kind: input, shape index: {}]
  %s1 = inlined_call_operand.vmem [shape: f32[32,128], index: 1, kind: input, shape index: {}]
  %s2 = inlined_call_operand.vmem [shape: f32[1,128], index: 2, kind: input, shape index: {}]
  %s3 = inlined_call_operand.vmem [shape: f32[2,128], index: 3, kind: output, shape index: {}]
  %s4 = sld [smem:[#allocation0]]
  $region22: #{patch_embed_forward.1} parent=0
    _
  %s6 = ssub.s32 1, %s4
  %s7 = scalar_select 0, %s6, %s4
  // Predicated region
  $region2: #{patch_embed_forward.1} parent=0 // pred_check
    _
  $region3: #{patch_embed_forward.1} parent=0 // pred_check_branch
    %9 = sbr.rel (0) target = $region5
  $region4: #{patch_embed_forward.1} parent=0 // pred_region
    _
  $region5: #{patch_embed_forward.1} parent=0 // pred_fallthru
    _
  // Predicated region
  $region6: #{patch_embed_forward.1} parent=0 // pred_check
    _
  $region7: #{patch_embed_forward.1} parent=0 // pred_check_branch
    %11 = sbr.rel (0) target = $region9
  $region8: #{patch_embed_forward.1} parent=0 // pred_region
    _
  $region9: #{patch_embed_forward.1} parent=0 // pred_fallthru
    _
  // Predicated region
  $region10: #{patch_embed_forward.1} parent=0 // pred_check
    _
  $region11: #{patch_embed_forward.1} parent=0 // pred_check_branch
    %13 = sbr.rel (0) target = $region13
  $region12: #{patch_embed_forward.1} parent=0 // pred_region
    _
  $region13: #{patch_embed_forward.1} parent=0 // pred_fallthru
    _
  %v14 = vld [vmem:[%s0] sm:$0x3]
  %v15 = vld [vmem:[%s1] sm:$0xff]
  %v16 = vld [vmem:[%s1 + $0x8] sm:$0xff]
  %v17 = vld [vmem:[%s1 + $0x10] sm:$0xff]
  %v18 = vld [vmem:[%s1 + $0x18] sm:$0xff]
  %v19 = vld [vmem:[%s2] sm:$0x1]
  %v21 = vlaneseq
  %v22 = vshrl.u32 %v21, 7
  %v23 = vsub.s32 0, %v22
  %v24 = vrot.slane %v19, %v23
  %vm26 = vcmask 261120
  %v28 = vsel %vm26, %v14, 0
  %30 = vmatprep.subr.mxu0 0.0
  %31 = vmatpush1.msra.mxu0 %v15
  %32 = vmatprep.subr.mxu0 0.0
  %33 = vmatpush1.msra.mxu0 %v16
  %34 = vmatprep.subr.mxu0 0.0
  %35 = vmatpush1.msra.mxu0 %v17
  %36 = vmatprep.subr.mxu0 0.0
  %37 = vmatpush1.msra.mxu0 %v18
  %38 = vmatprep.subr.mxu0 0.0
  %39 = vmatpush1.msra.mxu0 0.0
  %40 = vmatprep.subr.mxu0 0.0
  %41 = vmatpush1.msra.mxu0 0.0
  %42 = vmatprep.subr.mxu0 0.0
  %43 = vmatpush1.msra.mxu0 0.0
  %44 = vmatprep.subr.mxu0 0.0
  %45 = vmatpush1.msra.mxu0 0.0
  %46 = vmatprep.subr.mxu0 0.0
  %47 = vmatpush1.msra.mxu0 0.0
  %48 = vmatprep.subr.mxu0 0.0
  %49 = vmatpush1.msra.mxu0 0.0
  %50 = vmatprep.subr.mxu0 0.0
  %51 = vmatpush1.msra.mxu0 0.0
  %52 = vmatprep.subr.mxu0 0.0
  %53 = vmatpush1.msra.mxu0 0.0
  %54 = vmatprep.subr.mxu0 0.0
  %55 = vmatpush1.msra.mxu0 0.0
  %56 = vmatprep.subr.mxu0 0.0
  %57 = vmatpush1.msra.mxu0 0.0
  %58 = vmatprep.subr.mxu0 0.0
  %59 = vmatpush1.msra.mxu0 0.0
  %60 = vmatprep.subr.mxu0 0.0
  %61 = vmatpush1.msra.mxu0 0.0
  %62 = vmatprep.subr.mxu0 0.0
  %63 = vmatpush1.msra.mxu0 0.0
  %64 = vmatprep.subr.mxu0 0.0
  %65 = vmatpush1.msra.mxu0 0.0
  %66 = vmatprep.subr.mxu0 0.0
  %67 = vmatpush1.msra.mxu0 0.0
  %68 = vmatprep.subr.mxu0 0.0
  %69 = vmatpush1.msra.mxu0 0.0
  %70 = vmatprep.subr.mxu0 0.0
  %71 = vmatpush1.msra.mxu0 0.0
  %72 = vmatprep.subr.mxu0 0.0
  %73 = vmatpush1.msra.mxu0 0.0
  %74 = vmatprep.subr.mxu0 0.0
  %75 = vmatpush1.msra.mxu0 0.0
  %76 = vmatprep.subr.mxu0 0.0
  %77 = vmatpush1.msra.mxu0 0.0
  %78 = vmatprep.subr.mxu0 0.0
  %79 = vmatpush1.msra.mxu0 0.0
  %80 = vmatprep.subr.mxu0 0.0
  %81 = vmatpush1.msra.mxu0 0.0
  %82 = vmatprep.subr.mxu0 0.0
  %83 = vmatpush1.msra.mxu0 0.0
  %84 = vmatprep.subr.mxu0 0.0
  %85 = vmatpush1.msra.mxu0 0.0
  %86 = vmatprep.subr.mxu0 0.0
  %87 = vmatpush1.msra.mxu0 0.0
  %88 = vmatprep.subr.mxu0 0.0
  %89 = vmatpush1.msra.mxu0 0.0
  %90 = vmatprep.subr.mxu0 0.0
  %91 = vmatpush1.msra.mxu0 0.0
  %92 = vmatprep.subr.mxu0 0.0
  %93 = vmatpush1.msra.mxu0 0.0
  %94 = vmatprep.mubr.f32.mxu0 0.0
  %95 = vmatmul.mubr.f32.gmra.mrb[0].mxu0 %v28
  %v96 = vpop.f32.mrb[0].mxu0
  %v97 = vadd.f32 %v24, %v96
  %v98 = vpop.f32.mrb[0].mxu0
  %99 = vdwg.mxu0
  %100 = vst [vmem:[%s3] sm:$0x3] %v97
  // Predicated region
  $region14: #{patch_embed_forward.1} parent=0 // pred_check
    _
  $region15: #{patch_embed_forward.1} parent=0 // pred_check_branch
    %102 = sbr.rel (0) target = $region17
  $region16: #{patch_embed_forward.1} parent=0 // pred_region
    _
  $region17: #{patch_embed_forward.1} parent=0 // pred_fallthru
    _
  // Predicated region
  $region18: #{patch_embed_forward.1} parent=0 // pred_check
    _
  $region19: #{patch_embed_forward.1} parent=0 // pred_check_branch
    %104 = sbr.rel (0) target = $region21
  $region20: #{patch_embed_forward.1} parent=0 // pred_region
    _
  $region21: #{patch_embed_forward.1} parent=0 // pred_fallthru
    _

</llo_original>
